<compile_context>
chip_gen: v7x
topology: tpu7x:2x2x1
jax: 0.10.0
libtpu: 0.0.40
codegen_flags: <defaults>
</compile_context>

<pallas_src>
import functools

import jax
import jax.numpy as jnp
from jax.experimental import pallas as pl
from jax.experimental.pallas import tpu as pltpu


# ---------------------------------------------------------------------------
# Fused loss kernel
# ---------------------------------------------------------------------------
def _fused_losses_kernel(rpn_params_ref, gt_rpn_params_ref, rpn_score_ref,
                         gt_rpn_label_ref, roi_params_ref, sample_params_ref,
                         roi_scores_ref, sample_label_ref, out_ref,
                         *, rpn_lamda, roi_lamda):
    # ---------------- RPN losses (anchor axis on lanes) ----------------
    rpn_label = gt_rpn_label_ref[...]                        # (1, A) int32
    rpn_valid = jnp.where(rpn_label >= 0, 1.0, 0.0)          # (1, A)
    rpn_pos = jnp.where(rpn_label > 0, 1.0, 0.0)             # (1, A)
    inv_rpn_den = 1.0 / jnp.sum(rpn_valid)                   # shared denominator
    # NOTE: mirrors PyTorch -- NaN/Inf if a batch has no valid anchors.

    # (1) masked smooth-L1 on the RPN box regression: (pred - gt) * w, w in {0,1}
    d1 = (rpn_params_ref[...] - gt_rpn_params_ref[...]) * rpn_pos    # (4, A)
    a1 = jnp.abs(d1)
    sl1 = jnp.where(a1 < 1.0, 0.5 * d1 * d1, a1 - 0.5)
    rpn_params_loss = rpn_lamda * jnp.sum(sl1) * inv_rpn_den

    # (2) RPN cross-entropy (ignore_index=-1), binary-logistic specialization:
    #     nll = softplus(+-(s1 - s0)); no lse/iota over a 2-wide class axis.
    s = rpn_score_ref[...]                                    # (2, A)
    delta = s[1:2, :] - s[0:1, :]                             # (1, A)
    x = jnp.where(rpn_label == 1, -delta, delta)
    nll = jnp.maximum(x, 0.0) + jnp.log(1.0 + jnp.exp(-jnp.abs(x)))
    rpn_class_loss = jnp.sum(nll * rpn_valid) * inv_rpn_den

    # ---------------- ROI losses (sample axis on lanes) ----------------
    roi_label = sample_label_ref[...]                         # (1, N) int32
    roi_valid = jnp.where(roi_label >= 0, 1.0, 0.0)
    roi_pos = jnp.where(roi_label > 0, 1.0, 0.0)
    inv_roi_den = 1.0 / jnp.sum(roi_valid)                    # shared denominator

    # (3) gather roi_params[n, label[n], :] as a masked reduction over the
    #     class axis (no jnp.tile, no data-dependent load), then masked smooth-L1.
    gt = sample_params_ref[...]                               # (4, N)
    n_class = roi_params_ref.shape[0]
    gathered = jnp.zeros_like(gt)
    for c in range(n_class):                                  # unrolled: 1 vreg FMA / class
        m = jnp.where(roi_label == c, 1.0, 0.0)               # (1, N)
        gathered = gathered + roi_params_ref[c] * m           # (4, N)
    d2 = (gathered - gt) * roi_pos
    a2 = jnp.abs(d2)
    sl2 = jnp.where(a2 < 1.0, 0.5 * d2 * d2, a2 - 0.5)
    roi_params_loss = roi_lamda * jnp.sum(sl2) * inv_roi_den

    # (4) ROI cross-entropy: logits (C, N), classes on sublanes; no one-hot.
    logits = roi_scores_ref[...]                              # (C, N)
    mx = jnp.max(logits, axis=0, keepdims=True)               # (1, N)
    z = logits - mx
    lse = jnp.log(jnp.sum(jnp.exp(z), axis=0, keepdims=True))   # (1, N)
    cls_iota = jax.lax.broadcasted_iota(jnp.int32, logits.shape, 0)
    picked = jnp.sum(jnp.where(cls_iota == roi_label, z, 0.0),
                     axis=0, keepdims=True)                   # z[label[n], n]
    roi_class_loss = jnp.sum((lse - picked) * roi_valid) * inv_roi_den

    # Scalar results -> SMEM vector (no padded VMEM tile / masked vst).
    out_ref[0] = rpn_params_loss
    out_ref[1] = rpn_class_loss
    out_ref[2] = roi_params_loss
    out_ref[3] = roi_class_loss
    out_ref[4] = rpn_params_loss + rpn_class_loss + roi_params_loss + roi_class_loss


# ---------------------------------------------------------------------------
# Trainer.forward (loss part) -- Pallas version
# ---------------------------------------------------------------------------
def trainer_forward(rpn_params, rpn_score, gt_rpn_params, gt_rpn_label,
                    roi_params, roi_scores, sample_params, sample_label,
                    rpn_lamda=3.0, roi_lamda=1.0):
    """Loss part of Trainer.forward as a single fused Pallas TPU kernel."""
    a = rpn_params.shape[0]
    n_sample, n_class = roi_scores.shape

    # Lane-dense relayout (wrapper-side layout plumbing): anchor / ROI axis -> lanes.
    rpn_params_t = rpn_params.astype(jnp.float32).T                      # (4, A)
    gt_rpn_params_t = gt_rpn_params.astype(jnp.float32).T                # (4, A)
    rpn_score_t = rpn_score.astype(jnp.float32).T                        # (2, A)
    gt_rpn_label_t = gt_rpn_label.astype(jnp.int32).reshape(1, a)        # (1, A)
    roi_params_t = (roi_params.astype(jnp.float32)
                    .reshape(n_sample, n_class, 4).transpose(1, 2, 0))   # (C, 4, N)
    roi_scores_t = roi_scores.astype(jnp.float32).T                      # (C, N)
    sample_params_t = sample_params.astype(jnp.float32).T                # (4, N)
    sample_label_t = sample_label.astype(jnp.int32).reshape(1, n_sample)  # (1, N)

    kernel = functools.partial(_fused_losses_kernel,
                               rpn_lamda=float(rpn_lamda),
                               roi_lamda=float(roi_lamda))
    vmem = pl.BlockSpec(memory_space=pltpu.MemorySpace.VMEM)
    losses = pl.pallas_call(
        kernel,
        out_shape=jax.ShapeDtypeStruct((5,), jnp.float32),
        in_specs=[vmem] * 8,
        out_specs=pl.BlockSpec(memory_space=pltpu.MemorySpace.SMEM),
    )(rpn_params_t, gt_rpn_params_t, rpn_score_t, gt_rpn_label_t,
      roi_params_t, sample_params_t, roi_scores_t, sample_label_t)

    return [losses[0], losses[1], losses[2], losses[3], losses[4]]


# ---------------------------------------------------------------------------
# Pure-JAX reference (mirrors the PyTorch math) for verification
# ---------------------------------------------------------------------------
def _ref_params_loss(pred, gt, label):
    w = (label > 0).astype(jnp.float32)[:, None]
    diff = pred * w - gt * w
    ad = jnp.abs(diff)
    per = jnp.where(ad < 1.0, 0.5 * diff * diff, ad - 0.5)
    return jnp.sum(per) / jnp.sum((label >= 0).astype(jnp.float32))


def _ref_cross_entropy(logits, label):
    logp = jax.nn.log_softmax(logits, axis=-1)
    valid = label >= 0
    safe = jnp.where(valid, label, 0)
    nll = -jnp.take_along_axis(logp, safe[:, None], axis=-1)[:, 0]
    v = valid.astype(jnp.float32)
    return jnp.sum(nll * v) / jnp.sum(v)


def _ref_forward(rpn_params, rpn_score, gt_rpn_params, gt_rpn_label,
                 roi_params, roi_scores, sample_params, sample_label):
    n = roi_params.shape[0]
    rp = roi_params.reshape(n, -1, 4)[jnp.arange(n), sample_label]
    l0 = 3.0 * _ref_params_loss(rpn_params, gt_rpn_params, gt_rpn_label)
    l1 = _ref_cross_entropy(rpn_score, gt_rpn_label)
    l2 = 1.0 * _ref_params_loss(rp, sample_params, sample_label)
    l3 = _ref_cross_entropy(roi_scores, sample_label)
    return [l0, l1, l2, l3, l0 + l1 + l2 + l3]


# ---------------------------------------------------------------------------
if __name__ == "__main__":
    key = jax.random.PRNGKey(0)
    ks = jax.random.split(key, 8)

    # Small synthetic shapes consistent with Trainer.forward (batch size 1):
    # image 1x3x16x16 -> 4x4 feature map, 9 anchors per location -> A = 144
    A = 4 * 4 * 9            # number of anchors
    N_SAMPLE = 32            # sampled ROIs from proposal_target
    N_CLASS = 8              # foreground classes + background

    rpn_params = jax.random.normal(ks[0], (A, 4), jnp.float32)
    rpn_score = jax.random.normal(ks[1], (A, 2), jnp.float32)
    gt_rpn_params = jax.random.normal(ks[2], (A, 4), jnp.float32)
    gt_rpn_label = jax.random.randint(ks[3], (A,), -1, 2, jnp.int32)
    gt_rpn_label = gt_rpn_label.at[0].set(1).at[1].set(0)   # ensure pos/neg exist

    roi_params = jax.random.normal(ks[4], (N_SAMPLE, N_CLASS * 4), jnp.float32)
    roi_scores = jax.random.normal(ks[5], (N_SAMPLE, N_CLASS), jnp.float32)
    sample_params = jax.random.normal(ks[6], (N_SAMPLE, 4), jnp.float32)
    sample_label = jax.random.randint(ks[7], (N_SAMPLE,), 0, N_CLASS, jnp.int32)
    sample_label = sample_label.at[0].set(1)                 # ensure a foreground ROI

    args = (rpn_params, rpn_score, gt_rpn_params, gt_rpn_label,
            roi_params, roi_scores, sample_params, sample_label)

    losses = jax.jit(trainer_forward)(*args)
    losses = [jax.block_until_ready(l) for l in losses]

    ref = _ref_forward(*args)
    for got, want in zip(losses, ref):
        assert jnp.allclose(got, want, rtol=2e-3, atol=2e-4), (got, want)

    print("KERNEL_OK")
</pallas_src>

<mosaic_0001>
module attributes {stable_mosaic.version = 11 : i64} {
  func.func @_fused_losses_kernel(%arg0: memref<4x144xf32, #tpu.memory_space<vmem>>, %arg1: memref<4x144xf32, #tpu.memory_space<vmem>>, %arg2: memref<2x144xf32, #tpu.memory_space<vmem>>, %arg3: memref<1x144xi32, #tpu.memory_space<vmem>>, %arg4: memref<8x4x32xf32, #tpu.memory_space<vmem>>, %arg5: memref<4x32xf32, #tpu.memory_space<vmem>>, %arg6: memref<8x32xf32, #tpu.memory_space<vmem>>, %arg7: memref<1x32xi32, #tpu.memory_space<vmem>>, %arg8: memref<5xf32, #tpu.memory_space<smem>>) attributes {dimension_semantics = [], scalar_prefetch = 0 : i64, scratch_operands = 0 : i64, tpu.core_type = #tpu.core_type<tc>} {
    %c0 = arith.constant 0 : index
    %c0_0 = arith.constant 0 : index
    %0 = vector.load %arg3[%c0, %c0_0] : memref<1x144xi32, #tpu.memory_space<vmem>>, vector<1x144xi32>
    %c0_i32 = arith.constant 0 : i32
    %1 = vector.broadcast %c0_i32 : i32 to vector<1x144xi32>
    %2 = arith.cmpi sge, %0, %1 : vector<1x144xi32>
    %cst = arith.constant 1.000000e+00 : f32
    %cst_1 = arith.constant 0.000000e+00 : f32
    %3 = vector.broadcast %cst : f32 to vector<1x144xf32>
    %4 = vector.broadcast %cst_1 : f32 to vector<1x144xf32>
    %5 = arith.select %2, %3, %4 : vector<1x144xi1>, vector<1x144xf32>
    %c0_i32_2 = arith.constant 0 : i32
    %6 = vector.broadcast %c0_i32_2 : i32 to vector<1x144xi32>
    %7 = arith.cmpi sgt, %0, %6 : vector<1x144xi32>
    %cst_3 = arith.constant 1.000000e+00 : f32
    %cst_4 = arith.constant 0.000000e+00 : f32
    %8 = vector.broadcast %cst_3 : f32 to vector<1x144xf32>
    %9 = vector.broadcast %cst_4 : f32 to vector<1x144xf32>
    %10 = arith.select %7, %8, %9 : vector<1x144xi1>, vector<1x144xf32>
    %11 = vector.shape_cast %5 : vector<1x144xf32> to vector<1x1x144xf32>
    %cst_5 = arith.constant dense<0.000000e+00> : vector<1xf32>
    %12 = vector.multi_reduction <add>, %11, %cst_5 [1, 2] : vector<1x1x144xf32> to vector<1xf32>
    %13 = vector.shape_cast %12 : vector<1xf32> to vector<1x1x1xf32>
    %14 = vector.extract %13[0, 0, 0] : f32 from vector<1x1x1xf32>
    %cst_6 = arith.constant 1.000000e+00 : f32
    %15 = arith.divf %cst_6, %14 : f32
    %c0_7 = arith.constant 0 : index
    %c0_8 = arith.constant 0 : index
    %16 = vector.load %arg0[%c0_7, %c0_8] : memref<4x144xf32, #tpu.memory_space<vmem>>, vector<4x144xf32>
    %c0_9 = arith.constant 0 : index
    %c0_10 = arith.constant 0 : index
    %17 = vector.load %arg1[%c0_9, %c0_10] : memref<4x144xf32, #tpu.memory_space<vmem>>, vector<4x144xf32>
    %18 = arith.subf %16, %17 : vector<4x144xf32>
    %19 = vector.broadcast %10 : vector<1x144xf32> to vector<4x144xf32>
    %20 = arith.mulf %18, %19 : vector<4x144xf32>
    %21 = math.absf %20 : vector<4x144xf32>
    %cst_11 = arith.constant 1.000000e+00 : f32
    %22 = vector.broadcast %cst_11 : f32 to vector<4x144xf32>
    %23 = arith.cmpf olt, %21, %22 : vector<4x144xf32>
    %cst_12 = arith.constant 5.000000e-01 : f32
    %24 = vector.broadcast %cst_12 : f32 to vector<4x144xf32>
    %25 = arith.mulf %24, %20 : vector<4x144xf32>
    %26 = arith.mulf %25, %20 : vector<4x144xf32>
    %cst_13 = arith.constant 5.000000e-01 : f32
    %27 = vector.broadcast %cst_13 : f32 to vector<4x144xf32>
    %28 = arith.subf %21, %27 : vector<4x144xf32>
    %29 = arith.select %23, %26, %28 : vector<4x144xi1>, vector<4x144xf32>
    %30 = vector.shape_cast %29 : vector<4x144xf32> to vector<1x4x144xf32>
    %cst_14 = arith.constant dense<0.000000e+00> : vector<1xf32>
    %31 = vector.multi_reduction <add>, %30, %cst_14 [1, 2] : vector<1x4x144xf32> to vector<1xf32>
    %32 = vector.shape_cast %31 : vector<1xf32> to vector<1x1x1xf32>
    %33 = vector.extract %32[0, 0, 0] : f32 from vector<1x1x1xf32>
    %cst_15 = arith.constant 3.000000e+00 : f32
    %34 = arith.mulf %cst_15, %33 : f32
    %35 = arith.mulf %34, %15 : f32
    %c0_16 = arith.constant 0 : index
    %c0_17 = arith.constant 0 : index
    %36 = vector.load %arg2[%c0_16, %c0_17] : memref<2x144xf32, #tpu.memory_space<vmem>>, vector<2x144xf32>
    %37 = vector.extract_strided_slice %36 {offsets = [1, 0], sizes = [1, 144], strides = [1, 1]} : vector<2x144xf32> to vector<1x144xf32>
    %38 = vector.extract_strided_slice %36 {offsets = [0, 0], sizes = [1, 144], strides = [1, 1]} : vector<2x144xf32> to vector<1x144xf32>
    %39 = arith.subf %37, %38 : vector<1x144xf32>
    %c1_i32 = arith.constant 1 : i32
    %40 = vector.broadcast %c1_i32 : i32 to vector<1x144xi32>
    %41 = arith.cmpi eq, %0, %40 : vector<1x144xi32>
    %cst_18 = arith.constant 0.000000e+00 : f32
    %42 = vector.broadcast %cst_18 : f32 to vector<1x144xf32>
    %43 = arith.subf %42, %39 : vector<1x144xf32>
    %44 = arith.select %41, %43, %39 : vector<1x144xi1>, vector<1x144xf32>
    %cst_19 = arith.constant 0.000000e+00 : f32
    %45 = vector.broadcast %cst_19 : f32 to vector<1x144xf32>
    %46 = arith.maximumf %44, %45 : vector<1x144xf32>
    %47 = math.absf %44 : vector<1x144xf32>
    %cst_20 = arith.constant 0.000000e+00 : f32
    %48 = vector.broadcast %cst_20 : f32 to vector<1x144xf32>
    %49 = arith.subf %48, %47 : vector<1x144xf32>
    %50 = math.exp %49 : vector<1x144xf32>
    %cst_21 = arith.constant 1.000000e+00 : f32
    %51 = vector.broadcast %cst_21 : f32 to vector<1x144xf32>
    %52 = arith.addf %51, %50 : vector<1x144xf32>
    %53 = math.log %52 : vector<1x144xf32>
    %54 = arith.addf %46, %53 : vector<1x144xf32>
    %55 = arith.mulf %54, %5 : vector<1x144xf32>
    %56 = vector.shape_cast %55 : vector<1x144xf32> to vector<1x1x144xf32>
    %cst_22 = arith.constant dense<0.000000e+00> : vector<1xf32>
    %57 = vector.multi_reduction <add>, %56, %cst_22 [1, 2] : vector<1x1x144xf32> to vector<1xf32>
    %58 = vector.shape_cast %57 : vector<1xf32> to vector<1x1x1xf32>
    %59 = vector.extract %58[0, 0, 0] : f32 from vector<1x1x1xf32>
    %60 = arith.mulf %59, %15 : f32
    %c0_23 = arith.constant 0 : index
    %c0_24 = arith.constant 0 : index
    %61 = vector.load %arg7[%c0_23, %c0_24] : memref<1x32xi32, #tpu.memory_space<vmem>>, vector<1x32xi32>
    %c0_i32_25 = arith.constant 0 : i32
    %62 = vector.broadcast %c0_i32_25 : i32 to vector<1x32xi32>
    %63 = arith.cmpi sge, %61, %62 : vector<1x32xi32>
    %cst_26 = arith.constant 1.000000e+00 : f32
    %cst_27 = arith.constant 0.000000e+00 : f32
    %64 = vector.broadcast %cst_26 : f32 to vector<1x32xf32>
    %65 = vector.broadcast %cst_27 : f32 to vector<1x32xf32>
    %66 = arith.select %63, %64, %65 : vector<1x32xi1>, vector<1x32xf32>
    %c0_i32_28 = arith.constant 0 : i32
    %67 = vector.broadcast %c0_i32_28 : i32 to vector<1x32xi32>
    %68 = arith.cmpi sgt, %61, %67 : vector<1x32xi32>
    %cst_29 = arith.constant 1.000000e+00 : f32
    %cst_30 = arith.constant 0.000000e+00 : f32
    %69 = vector.broadcast %cst_29 : f32 to vector<1x32xf32>
    %70 = vector.broadcast %cst_30 : f32 to vector<1x32xf32>
    %71 = arith.select %68, %69, %70 : vector<1x32xi1>, vector<1x32xf32>
    %72 = vector.shape_cast %66 : vector<1x32xf32> to vector<1x1x32xf32>
    %cst_31 = arith.constant dense<0.000000e+00> : vector<1xf32>
    %73 = vector.multi_reduction <add>, %72, %cst_31 [1, 2] : vector<1x1x32xf32> to vector<1xf32>
    %74 = vector.shape_cast %73 : vector<1xf32> to vector<1x1x1xf32>
    %75 = vector.extract %74[0, 0, 0] : f32 from vector<1x1x1xf32>
    %cst_32 = arith.constant 1.000000e+00 : f32
    %76 = arith.divf %cst_32, %75 : f32
    %c0_33 = arith.constant 0 : index
    %c0_34 = arith.constant 0 : index
    %77 = vector.load %arg5[%c0_33, %c0_34] : memref<4x32xf32, #tpu.memory_space<vmem>>, vector<4x32xf32>
    %cst_35 = arith.constant 0.000000e+00 : f32
    %78 = vector.broadcast %cst_35 : f32 to vector<4x32xf32>
    %c0_i32_36 = arith.constant 0 : i32
    %79 = vector.broadcast %c0_i32_36 : i32 to vector<1x32xi32>
    %80 = arith.cmpi eq, %61, %79 : vector<1x32xi32>
    %cst_37 = arith.constant 1.000000e+00 : f32
    %cst_38 = arith.constant 0.000000e+00 : f32
    %81 = vector.broadcast %cst_37 : f32 to vector<1x32xf32>
    %82 = vector.broadcast %cst_38 : f32 to vector<1x32xf32>
    %83 = arith.select %80, %81, %82 : vector<1x32xi1>, vector<1x32xf32>
    %c0_39 = arith.constant 0 : index
    %c0_40 = arith.constant 0 : index
    %c0_41 = arith.constant 0 : index
    %84 = vector.load %arg4[%c0_39, %c0_40, %c0_41] : memref<8x4x32xf32, #tpu.memory_space<vmem>>, vector<1x4x32xf32>
    %85 = vector.shape_cast %84 : vector<1x4x32xf32> to vector<4x32xf32>
    %86 = vector.broadcast %83 : vector<1x32xf32> to vector<4x32xf32>
    %87 = arith.mulf %85, %86 : vector<4x32xf32>
    %88 = arith.addf %78, %87 : vector<4x32xf32>
    %c1_i32_42 = arith.constant 1 : i32
    %89 = vector.broadcast %c1_i32_42 : i32 to vector<1x32xi32>
    %90 = arith.cmpi eq, %61, %89 : vector<1x32xi32>
    %cst_43 = arith.constant 1.000000e+00 : f32
    %cst_44 = arith.constant 0.000000e+00 : f32
    %91 = vector.broadcast %cst_43 : f32 to vector<1x32xf32>
    %92 = vector.broadcast %cst_44 : f32 to vector<1x32xf32>
    %93 = arith.select %90, %91, %92 : vector<1x32xi1>, vector<1x32xf32>
    %c1 = arith.constant 1 : index
    %c0_45 = arith.constant 0 : index
    %c0_46 = arith.constant 0 : index
    %94 = vector.load %arg4[%c1, %c0_45, %c0_46] : memref<8x4x32xf32, #tpu.memory_space<vmem>>, vector<1x4x32xf32>
    %95 = vector.shape_cast %94 : vector<1x4x32xf32> to vector<4x32xf32>
    %96 = vector.broadcast %93 : vector<1x32xf32> to vector<4x32xf32>
    %97 = arith.mulf %95, %96 : vector<4x32xf32>
    %98 = arith.addf %88, %97 : vector<4x32xf32>
    %c2_i32 = arith.constant 2 : i32
    %99 = vector.broadcast %c2_i32 : i32 to vector<1x32xi32>
    %100 = arith.cmpi eq, %61, %99 : vector<1x32xi32>
    %cst_47 = arith.constant 1.000000e+00 : f32
    %cst_48 = arith.constant 0.000000e+00 : f32
    %101 = vector.broadcast %cst_47 : f32 to vector<1x32xf32>
    %102 = vector.broadcast %cst_48 : f32 to vector<1x32xf32>
    %103 = arith.select %100, %101, %102 : vector<1x32xi1>, vector<1x32xf32>
    %c2 = arith.constant 2 : index
    %c0_49 = arith.constant 0 : index
    %c0_50 = arith.constant 0 : index
    %104 = vector.load %arg4[%c2, %c0_49, %c0_50] : memref<8x4x32xf32, #tpu.memory_space<vmem>>, vector<1x4x32xf32>
    %105 = vector.shape_cast %104 : vector<1x4x32xf32> to vector<4x32xf32>
    %106 = vector.broadcast %103 : vector<1x32xf32> to vector<4x32xf32>
    %107 = arith.mulf %105, %106 : vector<4x32xf32>
    %108 = arith.addf %98, %107 : vector<4x32xf32>
    %c3_i32 = arith.constant 3 : i32
    %109 = vector.broadcast %c3_i32 : i32 to vector<1x32xi32>
    %110 = arith.cmpi eq, %61, %109 : vector<1x32xi32>
    %cst_51 = arith.constant 1.000000e+00 : f32
    %cst_52 = arith.constant 0.000000e+00 : f32
    %111 = vector.broadcast %cst_51 : f32 to vector<1x32xf32>
    %112 = vector.broadcast %cst_52 : f32 to vector<1x32xf32>
    %113 = arith.select %110, %111, %112 : vector<1x32xi1>, vector<1x32xf32>
    %c3 = arith.constant 3 : index
    %c0_53 = arith.constant 0 : index
    %c0_54 = arith.constant 0 : index
    %114 = vector.load %arg4[%c3, %c0_53, %c0_54] : memref<8x4x32xf32, #tpu.memory_space<vmem>>, vector<1x4x32xf32>
    %115 = vector.shape_cast %114 : vector<1x4x32xf32> to vector<4x32xf32>
    %116 = vector.broadcast %113 : vector<1x32xf32> to vector<4x32xf32>
    %117 = arith.mulf %115, %116 : vector<4x32xf32>
    %118 = arith.addf %108, %117 : vector<4x32xf32>
    %c4_i32 = arith.constant 4 : i32
    %119 = vector.broadcast %c4_i32 : i32 to vector<1x32xi32>
    %120 = arith.cmpi eq, %61, %119 : vector<1x32xi32>
    %cst_55 = arith.constant 1.000000e+00 : f32
    %cst_56 = arith.constant 0.000000e+00 : f32
    %121 = vector.broadcast %cst_55 : f32 to vector<1x32xf32>
    %122 = vector.broadcast %cst_56 : f32 to vector<1x32xf32>
    %123 = arith.select %120, %121, %122 : vector<1x32xi1>, vector<1x32xf32>
    %c4 = arith.constant 4 : index
    %c0_57 = arith.constant 0 : index
    %c0_58 = arith.constant 0 : index
    %124 = vector.load %arg4[%c4, %c0_57, %c0_58] : memref<8x4x32xf32, #tpu.memory_space<vmem>>, vector<1x4x32xf32>
    %125 = vector.shape_cast %124 : vector<1x4x32xf32> to vector<4x32xf32>
    %126 = vector.broadcast %123 : vector<1x32xf32> to vector<4x32xf32>
    %127 = arith.mulf %125, %126 : vector<4x32xf32>
    %128 = arith.addf %118, %127 : vector<4x32xf32>
    %c5_i32 = arith.constant 5 : i32
    %129 = vector.broadcast %c5_i32 : i32 to vector<1x32xi32>
    %130 = arith.cmpi eq, %61, %129 : vector<1x32xi32>
    %cst_59 = arith.constant 1.000000e+00 : f32
    %cst_60 = arith.constant 0.000000e+00 : f32
    %131 = vector.broadcast %cst_59 : f32 to vector<1x32xf32>
    %132 = vector.broadcast %cst_60 : f32 to vector<1x32xf32>
    %133 = arith.select %130, %131, %132 : vector<1x32xi1>, vector<1x32xf32>
    %c5 = arith.constant 5 : index
    %c0_61 = arith.constant 0 : index
    %c0_62 = arith.constant 0 : index
    %134 = vector.load %arg4[%c5, %c0_61, %c0_62] : memref<8x4x32xf32, #tpu.memory_space<vmem>>, vector<1x4x32xf32>
    %135 = vector.shape_cast %134 : vector<1x4x32xf32> to vector<4x32xf32>
    %136 = vector.broadcast %133 : vector<1x32xf32> to vector<4x32xf32>
    %137 = arith.mulf %135, %136 : vector<4x32xf32>
    %138 = arith.addf %128, %137 : vector<4x32xf32>
    %c6_i32 = arith.constant 6 : i32
    %139 = vector.broadcast %c6_i32 : i32 to vector<1x32xi32>
    %140 = arith.cmpi eq, %61, %139 : vector<1x32xi32>
    %cst_63 = arith.constant 1.000000e+00 : f32
    %cst_64 = arith.constant 0.000000e+00 : f32
    %141 = vector.broadcast %cst_63 : f32 to vector<1x32xf32>
    %142 = vector.broadcast %cst_64 : f32 to vector<1x32xf32>
    %143 = arith.select %140, %141, %142 : vector<1x32xi1>, vector<1x32xf32>
    %c6 = arith.constant 6 : index
    %c0_65 = arith.constant 0 : index
    %c0_66 = arith.constant 0 : index
    %144 = vector.load %arg4[%c6, %c0_65, %c0_66] : memref<8x4x32xf32, #tpu.memory_space<vmem>>, vector<1x4x32xf32>
    %145 = vector.shape_cast %144 : vector<1x4x32xf32> to vector<4x32xf32>
    %146 = vector.broadcast %143 : vector<1x32xf32> to vector<4x32xf32>
    %147 = arith.mulf %145, %146 : vector<4x32xf32>
    %148 = arith.addf %138, %147 : vector<4x32xf32>
    %c7_i32 = arith.constant 7 : i32
    %149 = vector.broadcast %c7_i32 : i32 to vector<1x32xi32>
    %150 = arith.cmpi eq, %61, %149 : vector<1x32xi32>
    %cst_67 = arith.constant 1.000000e+00 : f32
    %cst_68 = arith.constant 0.000000e+00 : f32
    %151 = vector.broadcast %cst_67 : f32 to vector<1x32xf32>
    %152 = vector.broadcast %cst_68 : f32 to vector<1x32xf32>
    %153 = arith.select %150, %151, %152 : vector<1x32xi1>, vector<1x32xf32>
    %c7 = arith.constant 7 : index
    %c0_69 = arith.constant 0 : index
    %c0_70 = arith.constant 0 : index
    %154 = vector.load %arg4[%c7, %c0_69, %c0_70] : memref<8x4x32xf32, #tpu.memory_space<vmem>>, vector<1x4x32xf32>
    %155 = vector.shape_cast %154 : vector<1x4x32xf32> to vector<4x32xf32>
    %156 = vector.broadcast %153 : vector<1x32xf32> to vector<4x32xf32>
    %157 = arith.mulf %155, %156 : vector<4x32xf32>
    %158 = arith.addf %148, %157 : vector<4x32xf32>
    %159 = arith.subf %158, %77 : vector<4x32xf32>
    %160 = vector.broadcast %71 : vector<1x32xf32> to vector<4x32xf32>
    %161 = arith.mulf %159, %160 : vector<4x32xf32>
    %162 = math.absf %161 : vector<4x32xf32>
    %cst_71 = arith.constant 1.000000e+00 : f32
    %163 = vector.broadcast %cst_71 : f32 to vector<4x32xf32>
    %164 = arith.cmpf olt, %162, %163 : vector<4x32xf32>
    %cst_72 = arith.constant 5.000000e-01 : f32
    %165 = vector.broadcast %cst_72 : f32 to vector<4x32xf32>
    %166 = arith.mulf %165, %161 : vector<4x32xf32>
    %167 = arith.mulf %166, %161 : vector<4x32xf32>
    %cst_73 = arith.constant 5.000000e-01 : f32
    %168 = vector.broadcast %cst_73 : f32 to vector<4x32xf32>
    %169 = arith.subf %162, %168 : vector<4x32xf32>
    %170 = arith.select %164, %167, %169 : vector<4x32xi1>, vector<4x32xf32>
    %171 = vector.shape_cast %170 : vector<4x32xf32> to vector<1x4x32xf32>
    %cst_74 = arith.constant dense<0.000000e+00> : vector<1xf32>
    %172 = vector.multi_reduction <add>, %171, %cst_74 [1, 2] : vector<1x4x32xf32> to vector<1xf32>
    %173 = vector.shape_cast %172 : vector<1xf32> to vector<1x1x1xf32>
    %174 = vector.extract %173[0, 0, 0] : f32 from vector<1x1x1xf32>
    %cst_75 = arith.constant 1.000000e+00 : f32
    %175 = arith.mulf %cst_75, %174 : f32
    %176 = arith.mulf %175, %76 : f32
    %c0_76 = arith.constant 0 : index
    %c0_77 = arith.constant 0 : index
    %177 = vector.load %arg6[%c0_76, %c0_77] : memref<8x32xf32, #tpu.memory_space<vmem>>, vector<8x32xf32>
    %cst_78 = arith.constant dense<0xFF800000> : vector<32xf32>
    %178 = vector.multi_reduction <maximumf>, %177, %cst_78 [0] : vector<8x32xf32> to vector<32xf32>
    %179 = vector.shape_cast %178 : vector<32xf32> to vector<1x32xf32>
    %180 = vector.broadcast %179 : vector<1x32xf32> to vector<8x32xf32>
    %181 = arith.subf %177, %180 : vector<8x32xf32>
    %182 = math.exp %181 : vector<8x32xf32>
    %cst_79 = arith.constant dense<0.000000e+00> : vector<32xf32>
    %183 = vector.multi_reduction <add>, %182, %cst_79 [0] : vector<8x32xf32> to vector<32xf32>
    %184 = vector.shape_cast %183 : vector<32xf32> to vector<1x32xf32>
    %185 = math.log %184 : vector<1x32xf32>
    %186 = tpu.iota {dimensions = array<i32: 0>} : vector<8x32xi32>
    %187 = vector.broadcast %61 : vector<1x32xi32> to vector<8x32xi32>
    %188 = arith.cmpi eq, %186, %187 : vector<8x32xi32>
    %cst_80 = arith.constant 0.000000e+00 : f32
    %189 = vector.broadcast %cst_80 : f32 to vector<8x32xf32>
    %190 = arith.select %188, %181, %189 : vector<8x32xi1>, vector<8x32xf32>
    %cst_81 = arith.constant dense<0.000000e+00> : vector<32xf32>
    %191 = vector.multi_reduction <add>, %190, %cst_81 [0] : vector<8x32xf32> to vector<32xf32>
    %192 = vector.shape_cast %191 : vector<32xf32> to vector<1x32xf32>
    %193 = arith.subf %185, %192 : vector<1x32xf32>
    %194 = arith.mulf %193, %66 : vector<1x32xf32>
    %195 = vector.shape_cast %194 : vector<1x32xf32> to vector<1x1x32xf32>
    %cst_82 = arith.constant dense<0.000000e+00> : vector<1xf32>
    %196 = vector.multi_reduction <add>, %195, %cst_82 [1, 2] : vector<1x1x32xf32> to vector<1xf32>
    %197 = vector.shape_cast %196 : vector<1xf32> to vector<1x1x1xf32>
    %198 = vector.extract %197[0, 0, 0] : f32 from vector<1x1x1xf32>
    %199 = arith.mulf %198, %76 : f32
    %c0_83 = arith.constant 0 : index
    %200 = memref.load %arg8[%c0_83] : memref<5xf32, #tpu.memory_space<smem>>
    memref.store %35, %arg8[%c0_83] : memref<5xf32, #tpu.memory_space<smem>>
    %c1_84 = arith.constant 1 : index
    %201 = memref.load %arg8[%c1_84] : memref<5xf32, #tpu.memory_space<smem>>
    memref.store %60, %arg8[%c1_84] : memref<5xf32, #tpu.memory_space<smem>>
    %c2_85 = arith.constant 2 : index
    %202 = memref.load %arg8[%c2_85] : memref<5xf32, #tpu.memory_space<smem>>
    memref.store %176, %arg8[%c2_85] : memref<5xf32, #tpu.memory_space<smem>>
    %c3_86 = arith.constant 3 : index
    %203 = memref.load %arg8[%c3_86] : memref<5xf32, #tpu.memory_space<smem>>
    memref.store %199, %arg8[%c3_86] : memref<5xf32, #tpu.memory_space<smem>>
    %204 = arith.addf %35, %60 : f32
    %205 = arith.addf %204, %176 : f32
    %206 = arith.addf %205, %199 : f32
    %c4_87 = arith.constant 4 : index
    %207 = memref.load %arg8[%c4_87] : memref<5xf32, #tpu.memory_space<smem>>
    memref.store %206, %arg8[%c4_87] : memref<5xf32, #tpu.memory_space<smem>>
    return
  }
}

</mosaic_0001>

<llo_original>
// kernel: trainer_forward.1
$region0: #{trainer_forward.1}
  #allocation0 [shape = 'u32[]', space=smem, size = 0x4, offset = 0x4, fixed_abs, tag = 'smem constant byte address 0x4 - core index']
  #allocation1 [shape = 'u32[144,128]{1,0:T(1,128)}', space=vmem, size = 0x12000, scoped, tag = 'internal scratch']
  %s0 = inlined_call_operand.vmem [shape: f32[4,144], index: 0, kind: input, shape index: {}]
  %s1 = inlined_call_operand.vmem [shape: f32[4,144], index: 1, kind: input, shape index: {}]
  %s2 = inlined_call_operand.vmem [shape: f32[2,144], index: 2, kind: input, shape index: {}]
  %s3 = inlined_call_operand.vmem [shape: s32[1,144], index: 3, kind: input, shape index: {}]
  %s4 = inlined_call_operand.vmem [shape: f32[8,4,32], index: 4, kind: input, shape index: {}]
  %s5 = inlined_call_operand.vmem [shape: f32[4,32], index: 5, kind: input, shape index: {}]
  %s6 = inlined_call_operand.vmem [shape: f32[8,32], index: 6, kind: input, shape index: {}]
  %s7 = inlined_call_operand.vmem [shape: s32[1,32], index: 7, kind: input, shape index: {}]
  %s8 = inlined_call_operand.vmem [shape: f32[5], index: 8, kind: output, shape index: {}]
  %s9 = sld [smem:[#allocation0]]
  $region42: #{trainer_forward.1} parent=0
    _
  %s11 = ssub.s32 1, %s9
  %s12 = scalar_select 0, %s11, %s9
  $region1: #{trainer_forward.1} parent=0
    #allocation2 [shape = 'u8[512]{0}', space=smem, size = 0x200, scoped, tag = 'output window, operand 0, single buffered']
    #allocation3 [shape = 's32[1]{0}', space=sflag, size = 0x4, scoped, tag = 'scoped memory for trainer_forward.1']
    %13 = vsyncpa [#allocation3], 0
    // Predicated region
    $region2: #{trainer_forward.1} parent=1 // pred_check
      _
    $region3: #{trainer_forward.1} parent=1 // pred_check_branch
      %15 = sbr.rel (0) target = $region5
    $region4: #{trainer_forward.1} parent=1 // pred_region
      _
    $region5: #{trainer_forward.1} parent=1 // pred_fallthru
      _
    // Predicated region
    $region6: #{trainer_forward.1} parent=1 // pred_check
      _
    $region7: #{trainer_forward.1} parent=1 // pred_check_branch
      %17 = sbr.rel (0) target = $region9
    $region8: #{trainer_forward.1} parent=1 // pred_region
      _
    $region9: #{trainer_forward.1} parent=1 // pred_fallthru
      _
    // Predicated region
    $region10: #{trainer_forward.1} parent=1 // pred_check
      _
    $region11: #{trainer_forward.1} parent=1 // pred_check_branch
      %19 = sbr.rel (0) target = $region13
    $region12: #{trainer_forward.1} parent=1 // pred_region
      _
    $region13: #{trainer_forward.1} parent=1 // pred_fallthru
      _
    // Predicated region
    $region14: #{trainer_forward.1} parent=1 // pred_check
      _
    $region15: #{trainer_forward.1} parent=1 // pred_check_branch
      %21 = sbr.rel (0) target = $region17
    $region16: #{trainer_forward.1} parent=1 // pred_region
      _
    $region17: #{trainer_forward.1} parent=1 // pred_fallthru
      _
    // Predicated region
    $region18: #{trainer_forward.1} parent=1 // pred_check
      _
    $region19: #{trainer_forward.1} parent=1 // pred_check_branch
      %23 = sbr.rel (0) target = $region21
    $region20: #{trainer_forward.1} parent=1 // pred_region
      _
    $region21: #{trainer_forward.1} parent=1 // pred_fallthru
      _
    // Predicated region
    $region22: #{trainer_forward.1} parent=1 // pred_check
      _
    $region23: #{trainer_forward.1} parent=1 // pred_check_branch
      %25 = sbr.rel (0) target = $region25
    $region24: #{trainer_forward.1} parent=1 // pred_region
      _
    $region25: #{trainer_forward.1} parent=1 // pred_fallthru
      _
    // Predicated region
    $region26: #{trainer_forward.1} parent=1 // pred_check
      _
    $region27: #{trainer_forward.1} parent=1 // pred_check_branch
      %27 = sbr.rel (0) target = $region29
    $region28: #{trainer_forward.1} parent=1 // pred_region
      _
    $region29: #{trainer_forward.1} parent=1 // pred_fallthru
      _
    // Predicated region
    $region30: #{trainer_forward.1} parent=1 // pred_check
      _
    $region31: #{trainer_forward.1} parent=1 // pred_check_branch
      %29 = sbr.rel (0) target = $region33
    $region32: #{trainer_forward.1} parent=1 // pred_region
      _
    $region33: #{trainer_forward.1} parent=1 // pred_fallthru
      _
    %v30 = vld [vmem:[%s3] sm:$0x3]
    %vm31 = vcmp.ge.s32.totalorder %v30, 0
    %v32 = vsel %vm31, 1.0, 0.0
    %vm33 = vcmp.gt.s32.totalorder %v30, 0
    %v34 = vsel %vm33, 1.0, 0.0
    %v36 = vlaneseq
    %v37 = vshrl.u32 %v36, 7
    %v38 = vsub.s32 0, %v37
    %v39 = vrot.slane %v32, %v38
    %v40 = vlaneseq
    %v41 = vshrl.u32 %v40, 7
    %v42 = vsub.s32 1, %v41
    %v43 = vrot.slane %v32, %v42
    %vm46 = vcmask 1040384
    %v47 = vsel %vm46, %v39, 0.0
    %vm48 = vcmask 122880
    %v49 = vsel %vm48, %v43, 0.0
    %v50 = vadd.f32 %v47, %v49
    %51 = vadd.xlane.f32.xlu0 %v50
    %v52 = vpop.xlane.xlu0 %51
    %v53 = vrot.slane %v52, 4
    %v54 = vadd.f32 %v52, %v53
    %v55 = vrot.slane %v54, 2
    %v56 = vadd.f32 %v54, %v55
    %v57 = vrot.slane %v56, 1
    %v58 = vadd.f32 %v56, %v57
    %s59 = vtos %v58
    %v60 = vstv %s59
    %v61 = vrcp.pop %v60
    %s62 = vtos %v61
    %v63 = vld [vmem:[%s0] sm:$0xff]
    %v64 = vld [vmem:[%s1] sm:$0xff]
    %v65 = vsub.f32 %v63, %v64
    %v67 = vlaneseq
    %v68 = vshrl.u32 %v67, 7
    %v69 = vsub.s32 0, %v68
    %v70 = vrot.slane %v34, %v69
    %v71 = vlaneseq
    %v72 = vshrl.u32 %v71, 7
    %v73 = vsub.s32 1, %v72
    %v74 = vrot.slane %v34, %v73
    %v75 = vcombine.low %v70, %v74
    %v77 = vmul.f32 %v65, %v75
    %v78 = vand.u32 2147483647, %v77
    %vm79 = vcmp.lt.f32.partialorder %v78, 1.0
    %v80 = vmul.f32 %v77, 0.5
    %v81 = vmul.f32 %v80, %v77
    %v82 = vsub.f32 %v78, 0.5
    %v83 = vsel %vm79, %v81, %v82
    %v85 = vcombine.high %v83, %v83
    %vm87 = vcmask 1043456
    %v88 = vsel %vm87, %v83, 0.0
    %vm89 = vcmask 125952
    %v90 = vsel %vm89, %v85, 0.0
    %v91 = vadd.f32 %v88, %v90
    %92 = vadd.xlane.f32.xlu0 %v91
    %v93 = vpop.xlane.xlu0 %92
    %v94 = vrot.slane %v93, 4
    %v95 = vadd.f32 %v93, %v94
    %v96 = vrot.slane %v95, 2
    %v97 = vadd.f32 %v95, %v96
    %v98 = vrot.slane %v97, 1
    %v99 = vadd.f32 %v97, %v98
    %s100 = vtos %v99
    %s101 = smul.f32 %s100, 3.0
    %s102 = smul.f32 %s101, %s62
    %v103 = vld [vmem:[%s2] sm:$0xf]
    %v105 = vrot.slane %v103, 7
    %v107 = vsub.f32 %v103, %v105
    %vm108 = vcmp.eq.s32.totalorder %v30, 1
    %v109 = vsub.f32 0.0, %v107
    %v112 = vunpack.c.l.s4 1966171168
    %v113 = vunpack.c.0.s8 %v112
    %v114 = vlaneseq
    %v115 = vshrl.u32 %v114, 7
    %v116 = vsub.s32 %v113, %v115
    %v117 = vrot.slane %v109, %v116
    %v118 = vcombine.high %v117, %v117
    %v122 = vunpack.c.l.s4 1966171168
    %v123 = vunpack.c.0.s8 %v122
    %v124 = vlaneseq
    %v125 = vshrl.u32 %v124, 7
    %v126 = vsub.s32 %v123, %v125
    %v127 = vrot.slane %v107, %v126
    %v128 = vcombine.high %v127, %v127
    %v130 = vsel %vm108, %v118, %v128
    %v131 = vmax.f32 %v130, 0.0
    %v132 = vand.u32 2147483647, %v130
    %v133 = vsub.f32 0.0, %v132
    %v134 = vmul.f32 %v133, 1.442695
    %v135 = vpow.pop %v134
    %v136 = vadd.f32 %v135, 1.0
    %v137 = vlog2.pop %v136
    %v138 = vmul.f32 %v137, 0.6931472
    %v139 = vadd.f32 %v131, %v138
    %v140 = vmul.f32 %v139, %v32
    %v142 = vlaneseq
    %v143 = vshrl.u32 %v142, 7
    %v144 = vsub.s32 0, %v143
    %v145 = vrot.slane %v140, %v144
    %v146 = vlaneseq
    %v147 = vshrl.u32 %v146, 7
    %v148 = vsub.s32 1, %v147
    %v149 = vrot.slane %v140, %v148
    %v152 = vsel %vm46, %v145, 0.0
    %v153 = vsel %vm48, %v149, 0.0
    %v154 = vadd.f32 %v152, %v153
    %155 = vadd.xlane.f32.xlu0 %v154
    %v156 = vpop.xlane.xlu0 %155
    %v157 = vrot.slane %v156, 4
    %v158 = vadd.f32 %v156, %v157
    %v159 = vrot.slane %v158, 2
    %v160 = vadd.f32 %v158, %v159
    %v161 = vrot.slane %v160, 1
    %v162 = vadd.f32 %v160, %v161
    %s163 = vtos %v162
    %s164 = smul.f32 %s163, %s62
    %v165 = vld [vmem:[%s7] sm:$0x1]
    %vm166 = vcmp.ge.s32.totalorder %v165, 0
    %v167 = vsel %vm166, 1.0, 0.0
    %vm168 = vcmp.gt.s32.totalorder %v165, 0
    %v169 = vsel %vm168, 1.0, 0.0
    %vm170 = vcmask 253952
    %v171 = vsel %vm170, %v167, 0.0
    %172 = vadd.xlane.f32.xlu0 %v171
    %v173 = vpop.xlane.xlu0 %172
    %v174 = vrot.slane %v173, 4
    %v175 = vadd.f32 %v173, %v174
    %v176 = vrot.slane %v175, 2
    %v177 = vadd.f32 %v175, %v176
    %v178 = vrot.slane %v177, 1
    %v179 = vadd.f32 %v177, %v178
    %s180 = vtos %v179
    %v181 = vstv %s180
    %v182 = vrcp.pop %v181
    %s183 = vtos %v182
    %v184 = vld [vmem:[%s5] sm:$0xf]
    %vm185 = vcmp.eq.s32.totalorder %v165, 0
    %v186 = vsel %vm185, 1.0, 0.0
    %v187 = vld [vmem:[%s4] sm:$0xf]
    %v189 = vlaneseq
    %v190 = vshrl.u32 %v189, 7
    %v191 = vsub.s32 0, %v190
    %v192 = vrot.slane %v186, %v191
    %v194 = vmul.f32 %v187, %v192
    %v195 = vadd.f32 %v194, 0.0
    %vm196 = vcmp.eq.s32.totalorder %v165, 1
    %v197 = vsel %vm196, 1.0, 0.0
    %s198 = scalar_lea.vmem %s4, 4
    %v199 = vld [vmem:[%s198] sm:$0xf]
    %v201 = vlaneseq
    %v202 = vshrl.u32 %v201, 7
    %v203 = vsub.s32 0, %v202
    %v204 = vrot.slane %v197, %v203
    %v206 = vmul.f32 %v199, %v204
    %v207 = vadd.f32 %v195, %v206
    %vm208 = vcmp.eq.s32.totalorder %v165, 2
    %v209 = vsel %vm208, 1.0, 0.0
    %s210 = scalar_lea.vmem %s4, 8
    %v211 = vld [vmem:[%s210] sm:$0xf]
    %v213 = vlaneseq
    %v214 = vshrl.u32 %v213, 7
    %v215 = vsub.s32 0, %v214
    %v216 = vrot.slane %v209, %v215
    %v218 = vmul.f32 %v211, %v216
    %v219 = vadd.f32 %v207, %v218
    %vm220 = vcmp.eq.s32.totalorder %v165, 3
    %v221 = vsel %vm220, 1.0, 0.0
    %s222 = scalar_lea.vmem %s4, 12
    %v223 = vld [vmem:[%s222] sm:$0xf]
    %v225 = vlaneseq
    %v226 = vshrl.u32 %v225, 7
    %v227 = vsub.s32 0, %v226
    %v228 = vrot.slane %v221, %v227
    %v230 = vmul.f32 %v223, %v228
    %v231 = vadd.f32 %v219, %v230
    %vm232 = vcmp.eq.s32.totalorder %v165, 4
    %v233 = vsel %vm232, 1.0, 0.0
    %s234 = scalar_lea.vmem %s4, 16
    %v235 = vld [vmem:[%s234] sm:$0xf]
    %v237 = vlaneseq
    %v238 = vshrl.u32 %v237, 7
    %v239 = vsub.s32 0, %v238
    %v240 = vrot.slane %v233, %v239
    %v242 = vmul.f32 %v235, %v240
    %v243 = vadd.f32 %v231, %v242
    %vm244 = vcmp.eq.s32.totalorder %v165, 5
    %v245 = vsel %vm244, 1.0, 0.0
    %s246 = scalar_lea.vmem %s4, 20
    %v247 = vld [vmem:[%s246] sm:$0xf]
    %v249 = vlaneseq
    %v250 = vshrl.u32 %v249, 7
    %v251 = vsub.s32 0, %v250
    %v252 = vrot.slane %v245, %v251
    %v254 = vmul.f32 %v247, %v252
    %v255 = vadd.f32 %v243, %v254
    %vm256 = vcmp.eq.s32.totalorder %v165, 6
    %v257 = vsel %vm256, 1.0, 0.0
    %s258 = scalar_lea.vmem %s4, 24
    %v259 = vld [vmem:[%s258] sm:$0xf]
    %v261 = vlaneseq
    %v262 = vshrl.u32 %v261, 7
    %v263 = vsub.s32 0, %v262
    %v264 = vrot.slane %v257, %v263
    %v266 = vmul.f32 %v259, %v264
    %v267 = vadd.f32 %v255, %v266
    %vm268 = vcmp.eq.s32.totalorder %v165, 7
    %v269 = vsel %vm268, 1.0, 0.0
    %s270 = scalar_lea.vmem %s4, 28
    %v271 = vld [vmem:[%s270] sm:$0xf]
    %v273 = vlaneseq
    %v274 = vshrl.u32 %v273, 7
    %v275 = vsub.s32 0, %v274
    %v276 = vrot.slane %v269, %v275
    %v278 = vmul.f32 %v271, %v276
    %v279 = vadd.f32 %v267, %v278
    %v280 = vsub.f32 %v279, %v184
    %v282 = vlaneseq
    %v283 = vshrl.u32 %v282, 7
    %v284 = vsub.s32 0, %v283
    %v285 = vrot.slane %v169, %v284
    %v287 = vmul.f32 %v280, %v285
    %v288 = vand.u32 2147483647, %v287
    %vm289 = vcmp.lt.f32.partialorder %v288, 1.0
    %v290 = vmul.f32 %v287, 0.5
    %v291 = vmul.f32 %v290, %v287
    %v292 = vsub.f32 %v288, 0.5
    %v293 = vsel %vm289, %v291, %v292
    %vm294 = vcmask 257024
    %v295 = vsel %vm294, %v293, 0.0
    %296 = vadd.xlane.f32.xlu0 %v295
    %v297 = vpop.xlane.xlu0 %296
    %v298 = vrot.slane %v297, 4
    %v299 = vadd.f32 %v297, %v298
    %v300 = vrot.slane %v299, 2
    %v301 = vadd.f32 %v299, %v300
    %v302 = vrot.slane %v301, 1
    %v303 = vadd.f32 %v301, %v302
    %s304 = vtos %v303
    %s305 = smul.f32 %s304, %s183
    %v306 = vld [vmem:[%s6] sm:$0xff]
    %vm307 = vcmask 261120
    %v308 = vsel %vm307, %v306, -inf
    %v309 = vrot.slane %v308, 4
    %v310 = vmax.f32 %v308, %v309
    %v311 = vrot.slane %v310, 2
    %v312 = vmax.f32 %v310, %v311
    %v313 = vrot.slane %v312, 1
    %v314 = vmax.f32 %v312, %v313
    %v315 = vsub.f32 %v306, %v314
    %v316 = vmul.f32 %v315, 1.442695
    %v317 = vpow.pop %v316
    %v318 = vsel %vm307, %v317, 0.0
    %v319 = vrot.slane %v318, 4
    %v320 = vadd.f32 %v318, %v319
    %v321 = vrot.slane %v320, 2
    %v322 = vadd.f32 %v320, %v321
    %v323 = vrot.slane %v322, 1
    %v324 = vadd.f32 %v322, %v323
    %v325 = vlog2.pop %v324
    %v326 = vmul.f32 %v325, 0.6931472
    %v327 = vlaneseq
    %v328 = vshrl.u32 %v327, 7
    %v329 = vlaneseq
    %v330 = vshrl.u32 %v329, 7
    %v331 = vsub.s32 0, %v330
    %v332 = vrot.slane %v165, %v331
    %vm333 = vcmp.eq.s32.totalorder %v328, %v332
    %v334 = vsel %vm333, %v315, 0.0
    %v335 = vsel %vm307, %v334, 0.0
    %v336 = vrot.slane %v335, 4
    %v337 = vadd.f32 %v335, %v336
    %v338 = vrot.slane %v337, 2
    %v339 = vadd.f32 %v337, %v338
    %v340 = vrot.slane %v339, 1
    %v341 = vadd.f32 %v339, %v340
    %v342 = vsub.f32 %v326, %v341
    %v343 = vmul.f32 %v342, %v167
    %v344 = vsel %vm170, %v343, 0.0
    %345 = vadd.xlane.f32.xlu0 %v344
    %v346 = vpop.xlane.xlu0 %345
    %v347 = vrot.slane %v346, 4
    %v348 = vadd.f32 %v346, %v347
    %v349 = vrot.slane %v348, 2
    %v350 = vadd.f32 %v348, %v349
    %v351 = vrot.slane %v350, 1
    %v352 = vadd.f32 %v350, %v351
    %s353 = vtos %v352
    %s354 = smul.f32 %s353, %s183
    %s355 = scalar_lea.smem [#allocation2], 0
    %356 = sst [smem:[%s355]] %s102
    %s357 = scalar_lea.smem [#allocation2], 1
    %358 = sst [smem:[%s357]] %s164
    %s359 = scalar_lea.smem [#allocation2], 2
    %360 = sst [smem:[%s359]] %s305
    %s361 = scalar_lea.smem [#allocation2], 3
    %362 = sst [smem:[%s361]] %s354
    %s363 = sadd.f32 %s102, %s164
    %s364 = sadd.f32 %s363, %s305
    %s365 = sadd.f32 %s364, %s354
    %s366 = scalar_lea.smem [#allocation2], 4
    %367 = sst [smem:[%s366]] %s365
    // Predicated region
    $region34: #{trainer_forward.1} parent=1 // pred_check
      _
    $region35: #{trainer_forward.1} parent=1 // pred_check_branch
      %369 = sbr.rel (0) target = $region37
    $region36: #{trainer_forward.1} parent=1 // pred_region
      %s371 = ssub.s32 16, 16
      %372 = vsyncadd [#allocation3], %s371
      %s374 = sshll.u32 %s8, 4
      %s375 = int_to_ptr.vmem [resolvable:$true] %s374
      %377 = dma.smem_to_vmem [#allocation2], 16, %s375, [#allocation3]
    $region37: #{trainer_forward.1} parent=1 // pred_fallthru
      _
    // Predicated region
    $region38: #{trainer_forward.1} parent=1 // pred_check
      _
    $region39: #{trainer_forward.1} parent=1 // pred_check_branch
      %379 = sbr.rel (0) target = $region41
    $region40: #{trainer_forward.1} parent=1 // pred_region
      %380 = dma.done [#allocation3], 16
    $region41: #{trainer_forward.1} parent=1 // pred_fallthru
      _
    %381 = sfence
    %382 = vsyncpa [#allocation3], 1

</llo_original>
